<compile_context>
chip_gen: v5e
topology: v5e:2x2
jax: 0.10.0
libtpu: 0.0.40
codegen_flags: <defaults>
</compile_context>

<pallas_src>
import functools

import jax
import jax.numpy as jnp
from jax import lax
from jax.experimental import pallas as pl
from jax.experimental.pallas import tpu as pltpu


def _round_up(x, m):
    return ((x + m - 1) // m) * m


def _divisor_tile(total, quantum, target):
    """Largest multiple of `quantum` that divides `total` and is <= target."""
    best = quantum
    t = quantum
    lim = min(total, target)
    while t <= lim:
        if total % t == 0:
            best = t
        t += quantum
    return best


def _vmem_limit_bytes(nbytes):
    # Explicit scoped-VMEM limit (default is only 16/32 MiB); keep below v7x's
    # 64 MiB physical per-TC budget.
    return int(min(64 * 1024 * 1024, max(32 * 1024 * 1024, 2 * nbytes)))


# ----------------------------------------------------------------------------
# Stage 1: tanh-RNN recurrence, gridded over (batch_block, time_chunk).
# ----------------------------------------------------------------------------
def rnn_recurrence_kernel(xh_ref, h0_ref, whh_t_ref, b_ref, hs_ref, hN_ref, h_scr):
    """xh_ref   : (Tc, Bb, Hp) gathered input projections W_ih.T[token]  (compute dtype)
       h0_ref   : (Bb, Hp)     initial hidden state                      (f32)
       whh_t_ref: (Hp, Hp)     W_hh.T                                    (compute dtype)
       b_ref    : (1, Hp)      b_ih + b_hh                               (f32)
       hs_ref   : (Tc, Bb, Hp) every h_t of this chunk -> feeds Linear   (compute dtype)
       hN_ref   : (Bb, Hp)     final hidden state                        (f32)
       h_scr    : (Bb, Hp)     f32 carry of h across time chunks
    """
    tc = pl.program_id(1)

    @pl.when(tc == 0)
    def _():
        h_scr[...] = h0_ref[...]

    whh_t = whh_t_ref[...]            # hoisted: loaded once per grid step
    b = b_ref[...]                    # (1, Hp) broadcasts over batch rows
    n_steps = xh_ref.shape[0]

    def step(t, h):
        pre = (xh_ref[t].astype(jnp.float32) + b
               + jnp.dot(h.astype(whh_t.dtype), whh_t,
                         preferred_element_type=jnp.float32))
        h_new = jnp.tanh(pre)
        hs_ref[t] = h_new.astype(hs_ref.dtype)   # aligned (Bb, Hp) tile store
        return h_new

    # TODO(synk): once Bp >= 16, split each step into two independent batch
    # half-chains so one half's MXU matmul overlaps the other half's tanh.
    h = lax.fori_loop(0, n_steps, step, h_scr[...], unroll=True)
    h_scr[...] = h
    hN_ref[...] = h


# ----------------------------------------------------------------------------
# Stage 2: hoisted output Linear, tiled over (rows, vocab) -> both TCs on v7x.
# ----------------------------------------------------------------------------
def linear_kernel(hs_ref, wlin_t_ref, blin_ref, out_ref):
    out_ref[...] = (jnp.dot(hs_ref[...], wlin_t_ref[...],
                            preferred_element_type=jnp.float32)
                    + blin_ref[...]).astype(out_ref.dtype)


@functools.partial(jax.jit, static_argnames=("vocab_size", "compute_dtype"))
def rnn_model_forward(inputs, state, params, vocab_size, compute_dtype=jnp.bfloat16):
    """inputs: (batch, seq) int32 tokens; state: (1, batch, hidden) f32.

    Returns (output, state) with output (seq*batch, vocab_size), matching the
    PyTorch RNNModel.forward.
    """
    W_ih, W_hh, b_ih, b_hh, W_lin, b_lin = params
    H = W_hh.shape[0]
    V = vocab_size
    B, S = inputs.shape

    Bp = _round_up(B, 8)      # sublane-aligned batch
    Hp = _round_up(H, 128)    # lane-aligned hidden
    Vp = _round_up(V, 128)    # lane-dense padded vocab
    cdt = compute_dtype
    itemsize = jnp.dtype(cdt).itemsize

    # --- wrapper glue (folded by XLA, runs once per call, outside the loop) ----
    # one_hot(tok) @ W_ih.T == W_ih.T[tok]  -> gather instead of (B,V)x(V,H) matmul.
    # TODO(synk): jnp.take clamps out-of-range token ids; torch one_hot would not.
    Wih_T = jnp.zeros((V, Hp), jnp.float32).at[:, :H].set(W_ih.T)
    Xh = jnp.take(Wih_T, inputs.T, axis=0)                              # (S, B, Hp)
    Xh_p = jnp.zeros((S, Bp, Hp), cdt).at[:, :B, :].set(Xh.astype(cdt))

    h0_p = jnp.zeros((Bp, Hp), jnp.float32).at[:B, :H].set(state[0])
    Whh_T = jnp.zeros((Hp, Hp), cdt).at[:H, :H].set(W_hh.T.astype(cdt))
    b = jnp.zeros((1, Hp), jnp.float32).at[0, :H].set(b_ih + b_hh)
    Wlin_T = jnp.zeros((Hp, Vp), cdt).at[:H, :V].set(W_lin.T.astype(cdt))
    blin = jnp.zeros((1, Vp), jnp.float32).at[0, :V].set(b_lin)

    # --- stage 1: recurrence ----------------------------------------------------
    Tc = _divisor_tile(S, 1, 8)                 # time chunk: streams Xh, bounds unroll
    Bb = Bp // 2 if (Bp % 16 == 0) else Bp      # 2 batch blocks -> both v7x TCs
    n_bb = Bp // Bb
    n_tc = S // Tc

    vmem_a = (2 * (2 * Tc * Bb * Hp * itemsize)     # xh + hs blocks, double-buffered
              + 2 * Hp * Hp * itemsize
              + 3 * 2 * Bb * Hp * 4 + 2 * Hp * 4)

    hs, hN_p = pl.pallas_call(
        rnn_recurrence_kernel,
        out_shape=(jax.ShapeDtypeStruct((S, Bp, Hp), cdt),
                   jax.ShapeDtypeStruct((Bp, Hp), jnp.float32)),
        grid=(n_bb, n_tc),
        in_specs=[
            pl.BlockSpec((Tc, Bb, Hp), lambda bb, tc: (tc, bb, 0)),
            pl.BlockSpec((Bb, Hp), lambda bb, tc: (bb, 0)),
            pl.BlockSpec((Hp, Hp), lambda bb, tc: (0, 0)),
            pl.BlockSpec((1, Hp), lambda bb, tc: (0, 0)),
        ],
        out_specs=(
            pl.BlockSpec((Tc, Bb, Hp), lambda bb, tc: (tc, bb, 0)),
            pl.BlockSpec((Bb, Hp), lambda bb, tc: (bb, 0)),
        ),
        scratch_shapes=[pltpu.VMEM((Bb, Hp), jnp.float32)],
        compiler_params=pltpu.CompilerParams(
            dimension_semantics=("parallel", "arbitrary"),
            vmem_limit_bytes=_vmem_limit_bytes(vmem_a)),
    )(Xh_p, h0_p, Whh_T, b)

    # --- stage 2: tiled output Linear --------------------------------------------
    R = S * Bp
    hs2 = hs.reshape(R, Hp)                      # contiguous reshape, free
    tm = _divisor_tile(R, 8, 256)
    tn = _divisor_tile(Vp, 128, 512)

    vmem_b = 2 * (tm * Hp * itemsize + Hp * tn * itemsize + tn * 4 + tm * tn * 4)

    out_padded = pl.pallas_call(
        linear_kernel,
        out_shape=jax.ShapeDtypeStruct((R, Vp), jnp.float32),
        grid=(R // tm, Vp // tn),
        in_specs=[
            pl.BlockSpec((tm, Hp), lambda i, j: (i, 0)),
            pl.BlockSpec((Hp, tn), lambda i, j: (0, j)),
            pl.BlockSpec((1, tn), lambda i, j: (0, j)),
        ],
        out_specs=pl.BlockSpec((tm, tn), lambda i, j: (i, j)),
        compiler_params=pltpu.CompilerParams(
            dimension_semantics=("parallel", "parallel"),
            vmem_limit_bytes=_vmem_limit_bytes(vmem_b)),
    )(hs2, Wlin_T, blin)

    # slice off batch / vocab / hidden padding
    output = out_padded.reshape(S, Bp, Vp)[:, :B, :V].reshape(S * B, V)
    hN = hN_p[:B, :H][None]
    return output, hN


def reference_forward(inputs, state, params, vocab_size):
    """Pure-JAX reference matching torch semantics (for verification)."""
    W_ih, W_hh, b_ih, b_hh, W_lin, b_lin = params
    X = jax.nn.one_hot(inputs.T, vocab_size, dtype=jnp.float32)   # (S, B, V)
    h = state[0]

    def step(h, x_t):
        h_new = jnp.tanh(x_t @ W_ih.T + b_ih + h @ W_hh.T + b_hh)
        return h_new, h_new

    hN, Y = jax.lax.scan(step, h, X)
    output = Y.reshape(-1, Y.shape[-1]) @ W_lin.T + b_lin
    return output, hN[None]


if __name__ == "__main__":
    vocab_size = 32
    num_hiddens = 32
    batch = 4
    seq = 8

    key = jax.random.PRNGKey(0)
    k1, k2, k3, k4, k5, k6, k7 = jax.random.split(key, 7)
    scale = 0.1
    W_ih = scale * jax.random.normal(k1, (num_hiddens, vocab_size), jnp.float32)
    W_hh = scale * jax.random.normal(k2, (num_hiddens, num_hiddens), jnp.float32)
    b_ih = scale * jax.random.normal(k3, (num_hiddens,), jnp.float32)
    b_hh = scale * jax.random.normal(k4, (num_hiddens,), jnp.float32)
    W_lin = scale * jax.random.normal(k5, (vocab_size, num_hiddens), jnp.float32)
    b_lin = scale * jax.random.normal(k6, (vocab_size,), jnp.float32)
    params = (W_ih, W_hh, b_ih, b_hh, W_lin, b_lin)

    inputs = jax.random.randint(k7, (batch, seq), 0, vocab_size, jnp.int32)
    # begin_state: zeros of shape (num_directions * num_layers, batch, hidden)
    state0 = jnp.zeros((1, batch, num_hiddens), jnp.float32)

    ref_out, ref_state = reference_forward(inputs, state0, params, vocab_size)

    # Exact path (f32 operands): verifies structure / padding / slicing tightly.
    out32, st32 = rnn_model_forward(inputs, state0, params, vocab_size,
                                    compute_dtype=jnp.float32)
    jax.block_until_ready((out32, st32))
    assert out32.shape == (seq * batch, vocab_size)
    assert st32.shape == (1, batch, num_hiddens)
    assert jnp.allclose(out32, ref_out, atol=1e-5, rtol=1e-5)
    assert jnp.allclose(st32, ref_state, atol=1e-5, rtol=1e-5)

    # Performance path (bf16 MXU operands, f32 accumulation): looser tolerance.
    out16, st16 = rnn_model_forward(inputs, state0, params, vocab_size,
                                    compute_dtype=jnp.bfloat16)
    jax.block_until_ready((out16, st16))
    assert out16.shape == (seq * batch, vocab_size)
    assert st16.shape == (1, batch, num_hiddens)
    assert jnp.allclose(out16, ref_out, atol=5e-2)
    assert jnp.allclose(st16, ref_state, atol=5e-2)

    print("KERNEL_OK")
</pallas_src>

<mosaic_0001>
module attributes {stable_mosaic.version = 11 : i64} {
  func.func @rnn_recurrence_kernel(%arg0: i32, %arg1: i32, %arg2: memref<8x8x128xf32, #tpu.memory_space<vmem>>, %arg3: memref<8x128xf32, #tpu.memory_space<vmem>>, %arg4: memref<128x128xf32, #tpu.memory_space<vmem>>, %arg5: memref<1x128xf32, #tpu.memory_space<vmem>>, %arg6: memref<8x8x128xf32, #tpu.memory_space<vmem>>, %arg7: memref<8x128xf32, #tpu.memory_space<vmem>>, %arg8: memref<8x128xf32, #tpu.memory_space<vmem>>) attributes {dimension_semantics = [#tpu.dimension_semantics<parallel>, #tpu.dimension_semantics<arbitrary>], iteration_bounds = array<i64: 1, 1>, scalar_prefetch = 0 : i64, scratch_operands = 1 : i64, tpu.core_type = #tpu.core_type<tc>, window_params = [{transform_indices = @transform_0, window_bounds = array<i64: 8, 8, 128>}, {transform_indices = @transform_1, window_bounds = array<i64: 8, 128>}, {pipeline_mode = #tpu.pipeline_mode<synchronous>, transform_indices = @transform_2, window_bounds = array<i64: 128, 128>}, {pipeline_mode = #tpu.pipeline_mode<synchronous>, transform_indices = @transform_3, window_bounds = array<i64: 1, 128>}, {transform_indices = @transform_4, window_bounds = array<i64: 8, 8, 128>}, {transform_indices = @transform_5, window_bounds = array<i64: 8, 128>}]} {
    %c0_i32 = arith.constant 0 : i32
    %0 = arith.cmpi eq, %arg1, %c0_i32 : i32
    %1 = arith.extui %0 : i1 to i32
    %c0_i32_0 = arith.constant 0 : i32
    %2 = arith.cmpi ne, %1, %c0_i32_0 : i32
    scf.if %2 {
      %c0_50 = arith.constant 0 : index
      %c0_51 = arith.constant 0 : index
      %104 = vector.load %arg3[%c0_50, %c0_51] : memref<8x128xf32, #tpu.memory_space<vmem>>, vector<8x128xf32>
      %c0_52 = arith.constant 0 : index
      %c0_53 = arith.constant 0 : index
      %105 = vector.load %arg8[%c0_52, %c0_53] : memref<8x128xf32, #tpu.memory_space<vmem>>, vector<8x128xf32>
      tpu.vector_store %arg8[%c0_52, %c0_53], %104 {strides = array<i32>} : memref<8x128xf32, #tpu.memory_space<vmem>>, vector<8x128xf32>,
    } else {
    }
    %c0 = arith.constant 0 : index
    %c0_1 = arith.constant 0 : index
    %3 = vector.load %arg4[%c0, %c0_1] : memref<128x128xf32, #tpu.memory_space<vmem>>, vector<128x128xf32>
    %c0_2 = arith.constant 0 : index
    %c0_3 = arith.constant 0 : index
    %4 = vector.load %arg5[%c0_2, %c0_3] : memref<1x128xf32, #tpu.memory_space<vmem>>, vector<1x128xf32>
    %c0_4 = arith.constant 0 : index
    %c0_5 = arith.constant 0 : index
    %5 = vector.load %arg8[%c0_4, %c0_5] : memref<8x128xf32, #tpu.memory_space<vmem>>, vector<8x128xf32>
    %c0_i32_6 = arith.constant 0 : i32
    %6 = arith.index_cast %c0_i32_6 : i32 to index
    %c0_7 = arith.constant 0 : index
    %c0_8 = arith.constant 0 : index
    %7 = vector.load %arg2[%6, %c0_7, %c0_8] : memref<8x8x128xf32, #tpu.memory_space<vmem>>, vector<1x8x128xf32>
    %8 = vector.shape_cast %7 : vector<1x8x128xf32> to vector<8x128xf32>
    %9 = vector.broadcast %4 : vector<1x128xf32> to vector<8x128xf32>
    %10 = arith.addf %8, %9 : vector<8x128xf32>
    %cst = arith.constant dense<0.000000e+00> : vector<8x128xf32>
    %11 = tpu.matmul %5, %3, %cst {dimension_numbers = #tpu.dot_dimension_numbers<[1], [0], [0], [1], [0, 0, 1, 1], [], []>} : vector<8x128xf32>, vector<128x128xf32>, vector<8x128xf32> -> vector<8x128xf32>
    %12 = arith.addf %10, %11 : vector<8x128xf32>
    %13 = math.tanh %12 : vector<8x128xf32>
    %14 = arith.index_cast %c0_i32_6 : i32 to index
    %c0_9 = arith.constant 0 : index
    %c0_10 = arith.constant 0 : index
    %15 = vector.load %arg6[%14, %c0_9, %c0_10] : memref<8x8x128xf32, #tpu.memory_space<vmem>>, vector<1x8x128xf32>
    %16 = vector.shape_cast %15 : vector<1x8x128xf32> to vector<8x128xf32>
    %17 = vector.shape_cast %13 : vector<8x128xf32> to vector<1x8x128xf32>
    tpu.vector_store %arg6[%14, %c0_9, %c0_10], %17 {strides = array<i32>} : memref<8x8x128xf32, #tpu.memory_space<vmem>>, vector<1x8x128xf32>,
    %c1_i32 = arith.constant 1 : i32
    %18 = arith.index_cast %c1_i32 : i32 to index
    %c0_11 = arith.constant 0 : index
    %c0_12 = arith.constant 0 : index
    %19 = vector.load %arg2[%18, %c0_11, %c0_12] : memref<8x8x128xf32, #tpu.memory_space<vmem>>, vector<1x8x128xf32>
    %20 = vector.shape_cast %19 : vector<1x8x128xf32> to vector<8x128xf32>
    %21 = vector.broadcast %4 : vector<1x128xf32> to vector<8x128xf32>
    %22 = arith.addf %20, %21 : vector<8x128xf32>
    %cst_13 = arith.constant dense<0.000000e+00> : vector<8x128xf32>
    %23 = tpu.matmul %13, %3, %cst_13 {dimension_numbers = #tpu.dot_dimension_numbers<[1], [0], [0], [1], [0, 0, 1, 1], [], []>} : vector<8x128xf32>, vector<128x128xf32>, vector<8x128xf32> -> vector<8x128xf32>
    %24 = arith.addf %22, %23 : vector<8x128xf32>
    %25 = math.tanh %24 : vector<8x128xf32>
    %26 = arith.index_cast %c1_i32 : i32 to index
    %c0_14 = arith.constant 0 : index
    %c0_15 = arith.constant 0 : index
    %27 = vector.load %arg6[%26, %c0_14, %c0_15] : memref<8x8x128xf32, #tpu.memory_space<vmem>>, vector<1x8x128xf32>
    %28 = vector.shape_cast %27 : vector<1x8x128xf32> to vector<8x128xf32>
    %29 = vector.shape_cast %25 : vector<8x128xf32> to vector<1x8x128xf32>
    tpu.vector_store %arg6[%26, %c0_14, %c0_15], %29 {strides = array<i32>} : memref<8x8x128xf32, #tpu.memory_space<vmem>>, vector<1x8x128xf32>,
    %c2_i32 = arith.constant 2 : i32
    %30 = arith.index_cast %c2_i32 : i32 to index
    %c0_16 = arith.constant 0 : index
    %c0_17 = arith.constant 0 : index
    %31 = vector.load %arg2[%30, %c0_16, %c0_17] : memref<8x8x128xf32, #tpu.memory_space<vmem>>, vector<1x8x128xf32>
    %32 = vector.shape_cast %31 : vector<1x8x128xf32> to vector<8x128xf32>
    %33 = vector.broadcast %4 : vector<1x128xf32> to vector<8x128xf32>
    %34 = arith.addf %32, %33 : vector<8x128xf32>
    %cst_18 = arith.constant dense<0.000000e+00> : vector<8x128xf32>
    %35 = tpu.matmul %25, %3, %cst_18 {dimension_numbers = #tpu.dot_dimension_numbers<[1], [0], [0], [1], [0, 0, 1, 1], [], []>} : vector<8x128xf32>, vector<128x128xf32>, vector<8x128xf32> -> vector<8x128xf32>
    %36 = arith.addf %34, %35 : vector<8x128xf32>
    %37 = math.tanh %36 : vector<8x128xf32>
    %38 = arith.index_cast %c2_i32 : i32 to index
    %c0_19 = arith.constant 0 : index
    %c0_20 = arith.constant 0 : index
    %39 = vector.load %arg6[%38, %c0_19, %c0_20] : memref<8x8x128xf32, #tpu.memory_space<vmem>>, vector<1x8x128xf32>
    %40 = vector.shape_cast %39 : vector<1x8x128xf32> to vector<8x128xf32>
    %41 = vector.shape_cast %37 : vector<8x128xf32> to vector<1x8x128xf32>
    tpu.vector_store %arg6[%38, %c0_19, %c0_20], %41 {strides = array<i32>} : memref<8x8x128xf32, #tpu.memory_space<vmem>>, vector<1x8x128xf32>,
    %c3_i32 = arith.constant 3 : i32
    %42 = arith.index_cast %c3_i32 : i32 to index
    %c0_21 = arith.constant 0 : index
    %c0_22 = arith.constant 0 : index
    %43 = vector.load %arg2[%42, %c0_21, %c0_22] : memref<8x8x128xf32, #tpu.memory_space<vmem>>, vector<1x8x128xf32>
    %44 = vector.shape_cast %43 : vector<1x8x128xf32> to vector<8x128xf32>
    %45 = vector.broadcast %4 : vector<1x128xf32> to vector<8x128xf32>
    %46 = arith.addf %44, %45 : vector<8x128xf32>
    %cst_23 = arith.constant dense<0.000000e+00> : vector<8x128xf32>
    %47 = tpu.matmul %37, %3, %cst_23 {dimension_numbers = #tpu.dot_dimension_numbers<[1], [0], [0], [1], [0, 0, 1, 1], [], []>} : vector<8x128xf32>, vector<128x128xf32>, vector<8x128xf32> -> vector<8x128xf32>
    %48 = arith.addf %46, %47 : vector<8x128xf32>
    %49 = math.tanh %48 : vector<8x128xf32>
    %50 = arith.index_cast %c3_i32 : i32 to index
    %c0_24 = arith.constant 0 : index
    %c0_25 = arith.constant 0 : index
    %51 = vector.load %arg6[%50, %c0_24, %c0_25] : memref<8x8x128xf32, #tpu.memory_space<vmem>>, vector<1x8x128xf32>
    %52 = vector.shape_cast %51 : vector<1x8x128xf32> to vector<8x128xf32>
    %53 = vector.shape_cast %49 : vector<8x128xf32> to vector<1x8x128xf32>
    tpu.vector_store %arg6[%50, %c0_24, %c0_25], %53 {strides = array<i32>} : memref<8x8x128xf32, #tpu.memory_space<vmem>>, vector<1x8x128xf32>,
    %c4_i32 = arith.constant 4 : i32
    %54 = arith.index_cast %c4_i32 : i32 to index
    %c0_26 = arith.constant 0 : index
    %c0_27 = arith.constant 0 : index
    %55 = vector.load %arg2[%54, %c0_26, %c0_27] : memref<8x8x128xf32, #tpu.memory_space<vmem>>, vector<1x8x128xf32>
    %56 = vector.shape_cast %55 : vector<1x8x128xf32> to vector<8x128xf32>
    %57 = vector.broadcast %4 : vector<1x128xf32> to vector<8x128xf32>
    %58 = arith.addf %56, %57 : vector<8x128xf32>
    %cst_28 = arith.constant dense<0.000000e+00> : vector<8x128xf32>
    %59 = tpu.matmul %49, %3, %cst_28 {dimension_numbers = #tpu.dot_dimension_numbers<[1], [0], [0], [1], [0, 0, 1, 1], [], []>} : vector<8x128xf32>, vector<128x128xf32>, vector<8x128xf32> -> vector<8x128xf32>
    %60 = arith.addf %58, %59 : vector<8x128xf32>
    %61 = math.tanh %60 : vector<8x128xf32>
    %62 = arith.index_cast %c4_i32 : i32 to index
    %c0_29 = arith.constant 0 : index
    %c0_30 = arith.constant 0 : index
    %63 = vector.load %arg6[%62, %c0_29, %c0_30] : memref<8x8x128xf32, #tpu.memory_space<vmem>>, vector<1x8x128xf32>
    %64 = vector.shape_cast %63 : vector<1x8x128xf32> to vector<8x128xf32>
    %65 = vector.shape_cast %61 : vector<8x128xf32> to vector<1x8x128xf32>
    tpu.vector_store %arg6[%62, %c0_29, %c0_30], %65 {strides = array<i32>} : memref<8x8x128xf32, #tpu.memory_space<vmem>>, vector<1x8x128xf32>,
    %c5_i32 = arith.constant 5 : i32
    %66 = arith.index_cast %c5_i32 : i32 to index
    %c0_31 = arith.constant 0 : index
    %c0_32 = arith.constant 0 : index
    %67 = vector.load %arg2[%66, %c0_31, %c0_32] : memref<8x8x128xf32, #tpu.memory_space<vmem>>, vector<1x8x128xf32>
    %68 = vector.shape_cast %67 : vector<1x8x128xf32> to vector<8x128xf32>
    %69 = vector.broadcast %4 : vector<1x128xf32> to vector<8x128xf32>
    %70 = arith.addf %68, %69 : vector<8x128xf32>
    %cst_33 = arith.constant dense<0.000000e+00> : vector<8x128xf32>
    %71 = tpu.matmul %61, %3, %cst_33 {dimension_numbers = #tpu.dot_dimension_numbers<[1], [0], [0], [1], [0, 0, 1, 1], [], []>} : vector<8x128xf32>, vector<128x128xf32>, vector<8x128xf32> -> vector<8x128xf32>
    %72 = arith.addf %70, %71 : vector<8x128xf32>
    %73 = math.tanh %72 : vector<8x128xf32>
    %74 = arith.index_cast %c5_i32 : i32 to index
    %c0_34 = arith.constant 0 : index
    %c0_35 = arith.constant 0 : index
    %75 = vector.load %arg6[%74, %c0_34, %c0_35] : memref<8x8x128xf32, #tpu.memory_space<vmem>>, vector<1x8x128xf32>
    %76 = vector.shape_cast %75 : vector<1x8x128xf32> to vector<8x128xf32>
    %77 = vector.shape_cast %73 : vector<8x128xf32> to vector<1x8x128xf32>
    tpu.vector_store %arg6[%74, %c0_34, %c0_35], %77 {strides = array<i32>} : memref<8x8x128xf32, #tpu.memory_space<vmem>>, vector<1x8x128xf32>,
    %c6_i32 = arith.constant 6 : i32
    %78 = arith.index_cast %c6_i32 : i32 to index
    %c0_36 = arith.constant 0 : index
    %c0_37 = arith.constant 0 : index
    %79 = vector.load %arg2[%78, %c0_36, %c0_37] : memref<8x8x128xf32, #tpu.memory_space<vmem>>, vector<1x8x128xf32>
    %80 = vector.shape_cast %79 : vector<1x8x128xf32> to vector<8x128xf32>
    %81 = vector.broadcast %4 : vector<1x128xf32> to vector<8x128xf32>
    %82 = arith.addf %80, %81 : vector<8x128xf32>
    %cst_38 = arith.constant dense<0.000000e+00> : vector<8x128xf32>
    %83 = tpu.matmul %73, %3, %cst_38 {dimension_numbers = #tpu.dot_dimension_numbers<[1], [0], [0], [1], [0, 0, 1, 1], [], []>} : vector<8x128xf32>, vector<128x128xf32>, vector<8x128xf32> -> vector<8x128xf32>
    %84 = arith.addf %82, %83 : vector<8x128xf32>
    %85 = math.tanh %84 : vector<8x128xf32>
    %86 = arith.index_cast %c6_i32 : i32 to index
    %c0_39 = arith.constant 0 : index
    %c0_40 = arith.constant 0 : index
    %87 = vector.load %arg6[%86, %c0_39, %c0_40] : memref<8x8x128xf32, #tpu.memory_space<vmem>>, vector<1x8x128xf32>
    %88 = vector.shape_cast %87 : vector<1x8x128xf32> to vector<8x128xf32>
    %89 = vector.shape_cast %85 : vector<8x128xf32> to vector<1x8x128xf32>
    tpu.vector_store %arg6[%86, %c0_39, %c0_40], %89 {strides = array<i32>} : memref<8x8x128xf32, #tpu.memory_space<vmem>>, vector<1x8x128xf32>,
    %c7_i32 = arith.constant 7 : i32
    %90 = arith.index_cast %c7_i32 : i32 to index
    %c0_41 = arith.constant 0 : index
    %c0_42 = arith.constant 0 : index
    %91 = vector.load %arg2[%90, %c0_41, %c0_42] : memref<8x8x128xf32, #tpu.memory_space<vmem>>, vector<1x8x128xf32>
    %92 = vector.shape_cast %91 : vector<1x8x128xf32> to vector<8x128xf32>
    %93 = vector.broadcast %4 : vector<1x128xf32> to vector<8x128xf32>
    %94 = arith.addf %92, %93 : vector<8x128xf32>
    %cst_43 = arith.constant dense<0.000000e+00> : vector<8x128xf32>
    %95 = tpu.matmul %85, %3, %cst_43 {dimension_numbers = #tpu.dot_dimension_numbers<[1], [0], [0], [1], [0, 0, 1, 1], [], []>} : vector<8x128xf32>, vector<128x128xf32>, vector<8x128xf32> -> vector<8x128xf32>
    %96 = arith.addf %94, %95 : vector<8x128xf32>
    %97 = math.tanh %96 : vector<8x128xf32>
    %98 = arith.index_cast %c7_i32 : i32 to index
    %c0_44 = arith.constant 0 : index
    %c0_45 = arith.constant 0 : index
    %99 = vector.load %arg6[%98, %c0_44, %c0_45] : memref<8x8x128xf32, #tpu.memory_space<vmem>>, vector<1x8x128xf32>
    %100 = vector.shape_cast %99 : vector<1x8x128xf32> to vector<8x128xf32>
    %101 = vector.shape_cast %97 : vector<8x128xf32> to vector<1x8x128xf32>
    tpu.vector_store %arg6[%98, %c0_44, %c0_45], %101 {strides = array<i32>} : memref<8x8x128xf32, #tpu.memory_space<vmem>>, vector<1x8x128xf32>,
    %c8_i32 = arith.constant 8 : i32
    %c0_46 = arith.constant 0 : index
    %c0_47 = arith.constant 0 : index
    %102 = vector.load %arg8[%c0_46, %c0_47] : memref<8x128xf32, #tpu.memory_space<vmem>>, vector<8x128xf32>
    tpu.vector_store %arg8[%c0_46, %c0_47], %97 {strides = array<i32>} : memref<8x128xf32, #tpu.memory_space<vmem>>, vector<8x128xf32>,
    %c0_48 = arith.constant 0 : index
    %c0_49 = arith.constant 0 : index
    %103 = vector.load %arg7[%c0_48, %c0_49] : memref<8x128xf32, #tpu.memory_space<vmem>>, vector<8x128xf32>
    tpu.vector_store %arg7[%c0_48, %c0_49], %97 {strides = array<i32>} : memref<8x128xf32, #tpu.memory_space<vmem>>, vector<8x128xf32>,
    return
  }
  func.func @transform_0(%arg0: i32, %arg1: i32) -> (i32, i32, i32) {
    %c0_i32 = arith.constant 0 : i32
    %c0_i32_0 = arith.constant 0 : i32
    return %arg1, %arg0, %c0_i32 : i32, i32, i32
  }
  func.func @transform_1(%arg0: i32, %arg1: i32) -> (i32, i32) {
    %c0_i32 = arith.constant 0 : i32
    %c0_i32_0 = arith.constant 0 : i32
    return %arg0, %c0_i32 : i32, i32
  }
  func.func @transform_2(%arg0: i32, %arg1: i32) -> (i32, i32) {
    %c0_i32 = arith.constant 0 : i32
    %c0_i32_0 = arith.constant 0 : i32
    %c0_i32_1 = arith.constant 0 : i32
    return %c0_i32, %c0_i32_0 : i32, i32
  }
  func.func @transform_3(%arg0: i32, %arg1: i32) -> (i32, i32) {
    %c0_i32 = arith.constant 0 : i32
    %c0_i32_0 = arith.constant 0 : i32
    %c0_i32_1 = arith.constant 0 : i32
    return %c0_i32, %c0_i32_0 : i32, i32
  }
  func.func @transform_4(%arg0: i32, %arg1: i32) -> (i32, i32, i32) {
    %c0_i32 = arith.constant 0 : i32
    %c0_i32_0 = arith.constant 0 : i32
    return %arg1, %arg0, %c0_i32 : i32, i32, i32
  }
  func.func @transform_5(%arg0: i32, %arg1: i32) -> (i32, i32) {
    %c0_i32 = arith.constant 0 : i32
    %c0_i32_0 = arith.constant 0 : i32
    return %arg0, %c0_i32 : i32, i32
  }
}

module attributes {stable_mosaic.version = 11 : i64} {
  func.func @linear_kernel(%arg0: i32, %arg1: i32, %arg2: memref<64x128xf32, #tpu.memory_space<vmem>>, %arg3: memref<128x128xf32, #tpu.memory_space<vmem>>, %arg4: memref<1x128xf32, #tpu.memory_space<vmem>>, %arg5: memref<64x128xf32, #tpu.memory_space<vmem>>) attributes {dimension_semantics = [#tpu.dimension_semantics<parallel>, #tpu.dimension_semantics<parallel>], iteration_bounds = array<i64: 1, 1>, scalar_prefetch = 0 : i64, scratch_operands = 0 : i64, tpu.core_type = #tpu.core_type<tc>, window_params = [{transform_indices = @transform_0, window_bounds = array<i64: 64, 128>}, {transform_indices = @transform_1, window_bounds = array<i64: 128, 128>}, {transform_indices = @transform_2, window_bounds = array<i64: 1, 128>}, {transform_indices = @transform_3, window_bounds = array<i64: 64, 128>}]} {
    %c0 = arith.constant 0 : index
    %c0_0 = arith.constant 0 : index
    %0 = vector.load %arg2[%c0, %c0_0] : memref<64x128xf32, #tpu.memory_space<vmem>>, vector<64x128xf32>
    %c0_1 = arith.constant 0 : index
    %c0_2 = arith.constant 0 : index
    %1 = vector.load %arg3[%c0_1, %c0_2] : memref<128x128xf32, #tpu.memory_space<vmem>>, vector<128x128xf32>
    %cst = arith.constant dense<0.000000e+00> : vector<64x128xf32>
    %2 = tpu.matmul %0, %1, %cst {dimension_numbers = #tpu.dot_dimension_numbers<[1], [0], [0], [1], [0, 0, 1, 1], [], []>} : vector<64x128xf32>, vector<128x128xf32>, vector<64x128xf32> -> vector<64x128xf32>
    %c0_3 = arith.constant 0 : index
    %c0_4 = arith.constant 0 : index
    %3 = vector.load %arg4[%c0_3, %c0_4] : memref<1x128xf32, #tpu.memory_space<vmem>>, vector<1x128xf32>
    %4 = vector.broadcast %3 : vector<1x128xf32> to vector<64x128xf32>
    %5 = arith.addf %2, %4 : vector<64x128xf32>
    %c0_5 = arith.constant 0 : index
    %c0_6 = arith.constant 0 : index
    %6 = vector.load %arg5[%c0_5, %c0_6] : memref<64x128xf32, #tpu.memory_space<vmem>>, vector<64x128xf32>
    tpu.vector_store %arg5[%c0_5, %c0_6], %5 {strides = array<i32>} : memref<64x128xf32, #tpu.memory_space<vmem>>, vector<64x128xf32>,
    return
  }
  func.func @transform_0(%arg0: i32, %arg1: i32) -> (i32, i32) {
    %c0_i32 = arith.constant 0 : i32
    %c0_i32_0 = arith.constant 0 : i32
    return %arg0, %c0_i32 : i32, i32
  }
  func.func @transform_1(%arg0: i32, %arg1: i32) -> (i32, i32) {
    %c0_i32 = arith.constant 0 : i32
    %c0_i32_0 = arith.constant 0 : i32
    return %c0_i32, %arg1 : i32, i32
  }
  func.func @transform_2(%arg0: i32, %arg1: i32) -> (i32, i32) {
    %c0_i32 = arith.constant 0 : i32
    %c0_i32_0 = arith.constant 0 : i32
    return %c0_i32, %arg1 : i32, i32
  }
  func.func @transform_3(%arg0: i32, %arg1: i32) -> (i32, i32) {
    %c0_i32 = arith.constant 0 : i32
    return %arg0, %arg1 : i32, i32
  }
}

</mosaic_0001>

<llo_original>
// kernel: rnn_model_forward.2
$region0: #{rnn_model_forward.2}
  #allocation0 [shape = 'u32[]', space=smem, size = 0x4, offset = 0x4, fixed_abs, tag = 'smem constant byte address 0x4 - core index']
  #allocation1 [shape = 'u32[72,128]{1,0:T(1,128)}', space=vmem, size = 0x9000, scoped, tag = 'internal scratch']
  #allocation2 [shape = 'f32[8,128]{1,0:T(8,128)}', space=vmem, size = 0x1000, scoped, tag = 'scratch operand']
  %s0 = inlined_call_operand.vmem [shape: f32[8,8,128], index: 0, kind: input, shape index: {}]
  %s1 = inlined_call_operand.vmem [shape: f32[8,128], index: 1, kind: input, shape index: {}]
  %s2 = inlined_call_operand.vmem [shape: f32[128,128], index: 2, kind: input, shape index: {}]
  %s3 = inlined_call_operand.vmem [shape: f32[1,128], index: 3, kind: input, shape index: {}]
  %s4 = inlined_call_operand.vmem [shape: f32[8,8,128], index: 4, kind: output, shape index: {0}]
  %s5 = inlined_call_operand.vmem [shape: f32[8,128], index: 5, kind: output, shape index: {1}]
  %6 = xla_tuple %s4, %s5
  %s7 = sld [smem:[#allocation0]]
  $region38: #{rnn_model_forward.2} parent=0
    _
  %s9 = ssub.s32 1, %s7
  %s10 = scalar_select 0, %s9, %s7
  // Predicated region
  $region2: #{rnn_model_forward.2} parent=0 // pred_check
    _
  $region3: #{rnn_model_forward.2} parent=0 // pred_check_branch
    %12 = sbr.rel (0) target = $region5
  $region4: #{rnn_model_forward.2} parent=0 // pred_region
    _
  $region5: #{rnn_model_forward.2} parent=0 // pred_fallthru
    _
  // Predicated region
  $region6: #{rnn_model_forward.2} parent=0 // pred_check
    _
  $region7: #{rnn_model_forward.2} parent=0 // pred_check_branch
    %14 = sbr.rel (0) target = $region9
  $region8: #{rnn_model_forward.2} parent=0 // pred_region
    _
  $region9: #{rnn_model_forward.2} parent=0 // pred_fallthru
    _
  // Predicated region
  $region10: #{rnn_model_forward.2} parent=0 // pred_check
    _
  $region11: #{rnn_model_forward.2} parent=0 // pred_check_branch
    %16 = sbr.rel (0) target = $region13
  $region12: #{rnn_model_forward.2} parent=0 // pred_region
    _
  $region13: #{rnn_model_forward.2} parent=0 // pred_fallthru
    _
  // Predicated region
  $region14: #{rnn_model_forward.2} parent=0 // pred_check
    _
  $region15: #{rnn_model_forward.2} parent=0 // pred_check_branch
    %18 = sbr.rel (0) target = $region17
  $region16: #{rnn_model_forward.2} parent=0 // pred_region
    _
  $region17: #{rnn_model_forward.2} parent=0 // pred_fallthru
    _
  %p19 = scmp.eq.s32.totalorder 0, 0
  // Predicated region
  $region18: #{rnn_model_forward.2} parent=0 // pred_check
    %p20 = pneg %p19
  $region19: #{rnn_model_forward.2} parent=0 // pred_check_branch
    %22 = sbr.rel (%p20) target = $region21
  $region20: #{rnn_model_forward.2} parent=0 // pred_region
    %v23 = vld [vmem:[%s1] sm:$0xff]
    %24 = vst [vmem:[#allocation2] sm:$0xff] %v23
  $region21: #{rnn_model_forward.2} parent=0 // pred_fallthru
    _
  %v25 = vld [vmem:[%s2] sm:$0xff]
  %v26 = vld [vmem:[%s2 + $0x8] sm:$0xff]
  %v27 = vld [vmem:[%s2 + $0x10] sm:$0xff]
  %v28 = vld [vmem:[%s2 + $0x18] sm:$0xff]
  %v29 = vld [vmem:[%s2 + $0x20] sm:$0xff]
  %v30 = vld [vmem:[%s2 + $0x28] sm:$0xff]
  %v31 = vld [vmem:[%s2 + $0x30] sm:$0xff]
  %v32 = vld [vmem:[%s2 + $0x38] sm:$0xff]
  %v33 = vld [vmem:[%s2 + $0x40] sm:$0xff]
  %v34 = vld [vmem:[%s2 + $0x48] sm:$0xff]
  %v35 = vld [vmem:[%s2 + $0x50] sm:$0xff]
  %v36 = vld [vmem:[%s2 + $0x58] sm:$0xff]
  %v37 = vld [vmem:[%s2 + $0x60] sm:$0xff]
  %v38 = vld [vmem:[%s2 + $0x68] sm:$0xff]
  %v39 = vld [vmem:[%s2 + $0x70] sm:$0xff]
  %v40 = vld [vmem:[%s2 + $0x78] sm:$0xff]
  %v41 = vld [vmem:[%s3] sm:$0x1]
  %v42 = vld [vmem:[#allocation2] sm:$0xff]
  %v43 = vld [vmem:[%s0] sm:$0xff]
  %v45 = vperm.slane %v41, 0
  %v47 = vadd.f32 %v43, %v45
  %48 = vmatpush.msra.mxu0 %v40
  %49 = vmatpush.msra.mxu0 %v39
  %50 = vmatpush.msra.mxu0 %v38
  %51 = vmatpush.msra.mxu0 %v37
  %52 = vmatpush.msra.mxu0 %v36
  %53 = vmatpush.msra.mxu0 %v35
  %54 = vmatpush.msra.mxu0 %v34
  %55 = vmatpush.msra.mxu0 %v33
  %56 = vmatpush.msra.mxu0 %v32
  %57 = vmatpush.msra.mxu0 %v31
  %58 = vmatpush.msra.mxu0 %v30
  %59 = vmatpush.msra.mxu0 %v29
  %60 = vmatpush.msra.mxu0 %v28
  %61 = vmatpush.msra.mxu0 %v27
  %62 = vmatpush.msra.mxu0 %v26
  %63 = vmatpush.msra.mxu0 %v25
  %64 = vmatmul.f32.gmra.mxu0 %v42
  %v65 = vpop.f32.mrf.mxu0
  %v66 = vadd.f32 0.0, %v65
  %67 = vdwg.mxu0
  %v68 = vadd.f32 %v47, %v66
  %v69 = vtanh.pop %v68
  %70 = vst [vmem:[%s4] sm:$0xff] %v69
  %s71 = scalar_lea.vmem %s0, 8
  %v72 = vld [vmem:[%s71] sm:$0xff]
  %v73 = vadd.f32 %v72, %v45
  %74 = vmatpush.msra.mxu0 %v40
  %75 = vmatpush.msra.mxu0 %v39
  %76 = vmatpush.msra.mxu0 %v38
  %77 = vmatpush.msra.mxu0 %v37
  %78 = vmatpush.msra.mxu0 %v36
  %79 = vmatpush.msra.mxu0 %v35
  %80 = vmatpush.msra.mxu0 %v34
  %81 = vmatpush.msra.mxu0 %v33
  %82 = vmatpush.msra.mxu0 %v32
  %83 = vmatpush.msra.mxu0 %v31
  %84 = vmatpush.msra.mxu0 %v30
  %85 = vmatpush.msra.mxu0 %v29
  %86 = vmatpush.msra.mxu0 %v28
  %87 = vmatpush.msra.mxu0 %v27
  %88 = vmatpush.msra.mxu0 %v26
  %89 = vmatpush.msra.mxu0 %v25
  %90 = vmatmul.f32.gmra.mxu0 %v69
  %v91 = vpop.f32.mrf.mxu0
  %v92 = vadd.f32 0.0, %v91
  %93 = vdwg.mxu0
  %v94 = vadd.f32 %v73, %v92
  %v95 = vtanh.pop %v94
  %s96 = scalar_lea.vmem %s4, 8
  %97 = vst [vmem:[%s96] sm:$0xff] %v95
  %s98 = scalar_lea.vmem %s0, 16
  %v99 = vld [vmem:[%s98] sm:$0xff]
  %v100 = vadd.f32 %v99, %v45
  %101 = vmatpush.msra.mxu0 %v40
  %102 = vmatpush.msra.mxu0 %v39
  %103 = vmatpush.msra.mxu0 %v38
  %104 = vmatpush.msra.mxu0 %v37
  %105 = vmatpush.msra.mxu0 %v36
  %106 = vmatpush.msra.mxu0 %v35
  %107 = vmatpush.msra.mxu0 %v34
  %108 = vmatpush.msra.mxu0 %v33
  %109 = vmatpush.msra.mxu0 %v32
  %110 = vmatpush.msra.mxu0 %v31
  %111 = vmatpush.msra.mxu0 %v30
  %112 = vmatpush.msra.mxu0 %v29
  %113 = vmatpush.msra.mxu0 %v28
  %114 = vmatpush.msra.mxu0 %v27
  %115 = vmatpush.msra.mxu0 %v26
  %116 = vmatpush.msra.mxu0 %v25
  %117 = vmatmul.f32.gmra.mxu0 %v95
  %v118 = vpop.f32.mrf.mxu0
  %v119 = vadd.f32 0.0, %v118
  %120 = vdwg.mxu0
  %v121 = vadd.f32 %v100, %v119
  %v122 = vtanh.pop %v121
  %s123 = scalar_lea.vmem %s4, 16
  %124 = vst [vmem:[%s123] sm:$0xff] %v122
  %s125 = scalar_lea.vmem %s0, 24
  %v126 = vld [vmem:[%s125] sm:$0xff]
  %v127 = vadd.f32 %v126, %v45
  %128 = vmatpush.msra.mxu0 %v40
  %129 = vmatpush.msra.mxu0 %v39
  %130 = vmatpush.msra.mxu0 %v38
  %131 = vmatpush.msra.mxu0 %v37
  %132 = vmatpush.msra.mxu0 %v36
  %133 = vmatpush.msra.mxu0 %v35
  %134 = vmatpush.msra.mxu0 %v34
  %135 = vmatpush.msra.mxu0 %v33
  %136 = vmatpush.msra.mxu0 %v32
  %137 = vmatpush.msra.mxu0 %v31
  %138 = vmatpush.msra.mxu0 %v30
  %139 = vmatpush.msra.mxu0 %v29
  %140 = vmatpush.msra.mxu0 %v28
  %141 = vmatpush.msra.mxu0 %v27
  %142 = vmatpush.msra.mxu0 %v26
  %143 = vmatpush.msra.mxu0 %v25
  %144 = vmatmul.f32.gmra.mxu0 %v122
  %v145 = vpop.f32.mrf.mxu0
  %v146 = vadd.f32 0.0, %v145
  %147 = vdwg.mxu0
  %v148 = vadd.f32 %v127, %v146
  %v149 = vtanh.pop %v148
  %s150 = scalar_lea.vmem %s4, 24
  %151 = vst [vmem:[%s150] sm:$0xff] %v149
  %s152 = scalar_lea.vmem %s0, 32
  %v153 = vld [vmem:[%s152] sm:$0xff]
  %v154 = vadd.f32 %v153, %v45
  %155 = vmatpush.msra.mxu0 %v40
  %156 = vmatpush.msra.mxu0 %v39
  %157 = vmatpush.msra.mxu0 %v38
  %158 = vmatpush.msra.mxu0 %v37
  %159 = vmatpush.msra.mxu0 %v36
  %160 = vmatpush.msra.mxu0 %v35
  %161 = vmatpush.msra.mxu0 %v34
  %162 = vmatpush.msra.mxu0 %v33
  %163 = vmatpush.msra.mxu0 %v32
  %164 = vmatpush.msra.mxu0 %v31
  %165 = vmatpush.msra.mxu0 %v30
  %166 = vmatpush.msra.mxu0 %v29
  %167 = vmatpush.msra.mxu0 %v28
  %168 = vmatpush.msra.mxu0 %v27
  %169 = vmatpush.msra.mxu0 %v26
  %170 = vmatpush.msra.mxu0 %v25
  %171 = vmatmul.f32.gmra.mxu0 %v149
  %v172 = vpop.f32.mrf.mxu0
  %v173 = vadd.f32 0.0, %v172
  %174 = vdwg.mxu0
  %v175 = vadd.f32 %v154, %v173
  %v176 = vtanh.pop %v175
  %s177 = scalar_lea.vmem %s4, 32
  %178 = vst [vmem:[%s177] sm:$0xff] %v176
  %s179 = scalar_lea.vmem %s0, 40
  %v180 = vld [vmem:[%s179] sm:$0xff]
  %v181 = vadd.f32 %v180, %v45
  %182 = vmatpush.msra.mxu0 %v40
  %183 = vmatpush.msra.mxu0 %v39
  %184 = vmatpush.msra.mxu0 %v38
  %185 = vmatpush.msra.mxu0 %v37
  %186 = vmatpush.msra.mxu0 %v36
  %187 = vmatpush.msra.mxu0 %v35
  %188 = vmatpush.msra.mxu0 %v34
  %189 = vmatpush.msra.mxu0 %v33
  %190 = vmatpush.msra.mxu0 %v32
  %191 = vmatpush.msra.mxu0 %v31
  %192 = vmatpush.msra.mxu0 %v30
  %193 = vmatpush.msra.mxu0 %v29
  %194 = vmatpush.msra.mxu0 %v28
  %195 = vmatpush.msra.mxu0 %v27
  %196 = vmatpush.msra.mxu0 %v26
  %197 = vmatpush.msra.mxu0 %v25
  %198 = vmatmul.f32.gmra.mxu0 %v176
  %v199 = vpop.f32.mrf.mxu0
  %v200 = vadd.f32 0.0, %v199
  %201 = vdwg.mxu0
  %v202 = vadd.f32 %v181, %v200
  %v203 = vtanh.pop %v202
  %s204 = scalar_lea.vmem %s4, 40
  %205 = vst [vmem:[%s204] sm:$0xff] %v203
  %s206 = scalar_lea.vmem %s0, 48
  %v207 = vld [vmem:[%s206] sm:$0xff]
  %v208 = vadd.f32 %v207, %v45
  %209 = vmatpush.msra.mxu0 %v40
  %210 = vmatpush.msra.mxu0 %v39
  %211 = vmatpush.msra.mxu0 %v38
  %212 = vmatpush.msra.mxu0 %v37
  %213 = vmatpush.msra.mxu0 %v36
  %214 = vmatpush.msra.mxu0 %v35
  %215 = vmatpush.msra.mxu0 %v34
  %216 = vmatpush.msra.mxu0 %v33
  %217 = vmatpush.msra.mxu0 %v32
  %218 = vmatpush.msra.mxu0 %v31
  %219 = vmatpush.msra.mxu0 %v30
  %220 = vmatpush.msra.mxu0 %v29
  %221 = vmatpush.msra.mxu0 %v28
  %222 = vmatpush.msra.mxu0 %v27
  %223 = vmatpush.msra.mxu0 %v26
  %224 = vmatpush.msra.mxu0 %v25
  %225 = vmatmul.f32.gmra.mxu0 %v203
  %v226 = vpop.f32.mrf.mxu0
  %v227 = vadd.f32 0.0, %v226
  %228 = vdwg.mxu0
  %v229 = vadd.f32 %v208, %v227
  %v230 = vtanh.pop %v229
  %s231 = scalar_lea.vmem %s4, 48
  %232 = vst [vmem:[%s231] sm:$0xff] %v230
  %s233 = scalar_lea.vmem %s0, 56
  %v234 = vld [vmem:[%s233] sm:$0xff]
  %v235 = vadd.f32 %v234, %v45
  %236 = vmatpush.msra.mxu0 %v40
  %237 = vmatpush.msra.mxu0 %v39
  %238 = vmatpush.msra.mxu0 %v38
  %239 = vmatpush.msra.mxu0 %v37
  %240 = vmatpush.msra.mxu0 %v36
  %241 = vmatpush.msra.mxu0 %v35
  %242 = vmatpush.msra.mxu0 %v34
  %243 = vmatpush.msra.mxu0 %v33
  %244 = vmatpush.msra.mxu0 %v32
  %245 = vmatpush.msra.mxu0 %v31
  %246 = vmatpush.msra.mxu0 %v30
  %247 = vmatpush.msra.mxu0 %v29
  %248 = vmatpush.msra.mxu0 %v28
  %249 = vmatpush.msra.mxu0 %v27
  %250 = vmatpush.msra.mxu0 %v26
  %251 = vmatpush.msra.mxu0 %v25
  %252 = vmatmul.f32.gmra.mxu0 %v230
  %v253 = vpop.f32.mrf.mxu0
  %v254 = vadd.f32 0.0, %v253
  %255 = vdwg.mxu0
  %v256 = vadd.f32 %v235, %v254
  %v257 = vtanh.pop %v256
  %s258 = scalar_lea.vmem %s4, 56
  %259 = vst [vmem:[%s258] sm:$0xff] %v257
  %260 = vst [vmem:[#allocation2] sm:$0xff] %v257
  %261 = vst [vmem:[%s5] sm:$0xff] %v257
  // Predicated region
  $region22: #{rnn_model_forward.2} parent=0 // pred_check
    _
  $region23: #{rnn_model_forward.2} parent=0 // pred_check_branch
    %263 = sbr.rel (0) target = $region25
  $region24: #{rnn_model_forward.2} parent=0 // pred_region
    _
  $region25: #{rnn_model_forward.2} parent=0 // pred_fallthru
    _
  // Predicated region
  $region26: #{rnn_model_forward.2} parent=0 // pred_check
    _
  $region27: #{rnn_model_forward.2} parent=0 // pred_check_branch
    %265 = sbr.rel (0) target = $region29
  $region28: #{rnn_model_forward.2} parent=0 // pred_region
    _
  $region29: #{rnn_model_forward.2} parent=0 // pred_fallthru
    _
  // Predicated region
  $region30: #{rnn_model_forward.2} parent=0 // pred_check
    _
  $region31: #{rnn_model_forward.2} parent=0 // pred_check_branch
    %267 = sbr.rel (0) target = $region33
  $region32: #{rnn_model_forward.2} parent=0 // pred_region
    _
  $region33: #{rnn_model_forward.2} parent=0 // pred_fallthru
    _
  // Predicated region
  $region34: #{rnn_model_forward.2} parent=0 // pred_check
    _
  $region35: #{rnn_model_forward.2} parent=0 // pred_check_branch
    %269 = sbr.rel (0) target = $region37
  $region36: #{rnn_model_forward.2} parent=0 // pred_region
    _
  $region37: #{rnn_model_forward.2} parent=0 // pred_fallthru
    _

// kernel: rnn_model_forward.3
$region0: #{rnn_model_forward.3}
  #allocation0 [shape = 'u32[]', space=smem, size = 0x4, offset = 0x4, fixed_abs, tag = 'smem constant byte address 0x4 - core index']
  #allocation1 [shape = 'u32[72,128]{1,0:T(1,128)}', space=vmem, size = 0x9000, scoped, tag = 'internal scratch']
  %s0 = inlined_call_operand.vmem [shape: f32[64,128], index: 0, kind: input, shape index: {}]
  %s1 = inlined_call_operand.vmem [shape: f32[128,128], index: 1, kind: input, shape index: {}]
  %s2 = inlined_call_operand.vmem [shape: f32[1,128], index: 2, kind: input, shape index: {}]
  %s3 = inlined_call_operand.vmem [shape: f32[64,128], index: 3, kind: output, shape index: {}]
  %s4 = sld [smem:[#allocation0]]
  $region22: #{rnn_model_forward.3} parent=0
    _
  %s6 = ssub.s32 1, %s4
  %s7 = scalar_select 0, %s6, %s4
  // Predicated region
  $region2: #{rnn_model_forward.3} parent=0 // pred_check
    _
  $region3: #{rnn_model_forward.3} parent=0 // pred_check_branch
    %9 = sbr.rel (0) target = $region5
  $region4: #{rnn_model_forward.3} parent=0 // pred_region
    _
  $region5: #{rnn_model_forward.3} parent=0 // pred_fallthru
    _
  // Predicated region
  $region6: #{rnn_model_forward.3} parent=0 // pred_check
    _
  $region7: #{rnn_model_forward.3} parent=0 // pred_check_branch
    %11 = sbr.rel (0) target = $region9
  $region8: #{rnn_model_forward.3} parent=0 // pred_region
    _
  $region9: #{rnn_model_forward.3} parent=0 // pred_fallthru
    _
  // Predicated region
  $region10: #{rnn_model_forward.3} parent=0 // pred_check
    _
  $region11: #{rnn_model_forward.3} parent=0 // pred_check_branch
    %13 = sbr.rel (0) target = $region13
  $region12: #{rnn_model_forward.3} parent=0 // pred_region
    _
  $region13: #{rnn_model_forward.3} parent=0 // pred_fallthru
    _
  %v14 = vld [vmem:[%s0] sm:$0xff]
  %v15 = vld [vmem:[%s0 + $0x8] sm:$0xff]
  %v16 = vld [vmem:[%s0 + $0x10] sm:$0xff]
  %v17 = vld [vmem:[%s0 + $0x18] sm:$0xff]
  %v18 = vld [vmem:[%s0 + $0x20] sm:$0xff]
  %v19 = vld [vmem:[%s0 + $0x28] sm:$0xff]
  %v20 = vld [vmem:[%s0 + $0x30] sm:$0xff]
  %v21 = vld [vmem:[%s0 + $0x38] sm:$0xff]
  %v22 = vld [vmem:[%s1] sm:$0xff]
  %v23 = vld [vmem:[%s1 + $0x8] sm:$0xff]
  %v24 = vld [vmem:[%s1 + $0x10] sm:$0xff]
  %v25 = vld [vmem:[%s1 + $0x18] sm:$0xff]
  %v26 = vld [vmem:[%s1 + $0x20] sm:$0xff]
  %v27 = vld [vmem:[%s1 + $0x28] sm:$0xff]
  %v28 = vld [vmem:[%s1 + $0x30] sm:$0xff]
  %v29 = vld [vmem:[%s1 + $0x38] sm:$0xff]
  %v30 = vld [vmem:[%s1 + $0x40] sm:$0xff]
  %v31 = vld [vmem:[%s1 + $0x48] sm:$0xff]
  %v32 = vld [vmem:[%s1 + $0x50] sm:$0xff]
  %v33 = vld [vmem:[%s1 + $0x58] sm:$0xff]
  %v34 = vld [vmem:[%s1 + $0x60] sm:$0xff]
  %v35 = vld [vmem:[%s1 + $0x68] sm:$0xff]
  %v36 = vld [vmem:[%s1 + $0x70] sm:$0xff]
  %v37 = vld [vmem:[%s1 + $0x78] sm:$0xff]
  %v38 = vld [vmem:[%s2] sm:$0x1]
  %v40 = vperm.slane %v38, 0
  %42 = vmatpush.msra.mxu0 %v37
  %43 = vmatpush.msra.mxu0 %v36
  %44 = vmatpush.msra.mxu0 %v35
  %45 = vmatpush.msra.mxu0 %v34
  %46 = vmatpush.msra.mxu0 %v33
  %47 = vmatpush.msra.mxu0 %v32
  %48 = vmatpush.msra.mxu0 %v31
  %49 = vmatpush.msra.mxu0 %v30
  %50 = vmatpush.msra.mxu0 %v29
  %51 = vmatpush.msra.mxu0 %v28
  %52 = vmatpush.msra.mxu0 %v27
  %53 = vmatpush.msra.mxu0 %v26
  %54 = vmatpush.msra.mxu0 %v25
  %55 = vmatpush.msra.mxu0 %v24
  %56 = vmatpush.msra.mxu0 %v23
  %57 = vmatpush.msra.mxu0 %v22
  %58 = vmatmul.f32.gmra.mxu0 %v14
  %v59 = vpop.f32.mrf.mxu0
  %v60 = vadd.f32 %v40, %v59
  %61 = vmatmul.f32.gmra.mxu0 %v15
  %v62 = vpop.f32.mrf.mxu0
  %v63 = vadd.f32 %v40, %v62
  %64 = vmatmul.f32.gmra.mxu0 %v16
  %v65 = vpop.f32.mrf.mxu0
  %v66 = vadd.f32 %v40, %v65
  %67 = vmatmul.f32.gmra.mxu0 %v17
  %v68 = vpop.f32.mrf.mxu0
  %v69 = vadd.f32 %v40, %v68
  %70 = vmatmul.f32.gmra.mxu0 %v18
  %v71 = vpop.f32.mrf.mxu0
  %v72 = vadd.f32 %v40, %v71
  %73 = vmatmul.f32.gmra.mxu0 %v19
  %v74 = vpop.f32.mrf.mxu0
  %v75 = vadd.f32 %v40, %v74
  %76 = vmatmul.f32.gmra.mxu0 %v20
  %v77 = vpop.f32.mrf.mxu0
  %v78 = vadd.f32 %v40, %v77
  %79 = vmatmul.f32.gmra.mxu0 %v21
  %v80 = vpop.f32.mrf.mxu0
  %v81 = vadd.f32 %v40, %v80
  %82 = vdwg.mxu0
  %83 = vst [vmem:[%s3] sm:$0xff] %v60
  %84 = vst [vmem:[%s3 + $0x8] sm:$0xff] %v63
  %85 = vst [vmem:[%s3 + $0x10] sm:$0xff] %v66
  %86 = vst [vmem:[%s3 + $0x18] sm:$0xff] %v69
  %87 = vst [vmem:[%s3 + $0x20] sm:$0xff] %v72
  %88 = vst [vmem:[%s3 + $0x28] sm:$0xff] %v75
  %89 = vst [vmem:[%s3 + $0x30] sm:$0xff] %v78
  %90 = vst [vmem:[%s3 + $0x38] sm:$0xff] %v81
  // Predicated region
  $region14: #{rnn_model_forward.3} parent=0 // pred_check
    _
  $region15: #{rnn_model_forward.3} parent=0 // pred_check_branch
    %92 = sbr.rel (0) target = $region17
  $region16: #{rnn_model_forward.3} parent=0 // pred_region
    _
  $region17: #{rnn_model_forward.3} parent=0 // pred_fallthru
    _
  // Predicated region
  $region18: #{rnn_model_forward.3} parent=0 // pred_check
    _
  $region19: #{rnn_model_forward.3} parent=0 // pred_check_branch
    %94 = sbr.rel (0) target = $region21
  $region20: #{rnn_model_forward.3} parent=0 // pred_region
    _
  $region21: #{rnn_model_forward.3} parent=0 // pred_fallthru
    _

</llo_original>
